<compile_context>
chip_gen: v7x
topology: tpu7x:2x2x1
jax: 0.10.0
libtpu: 0.0.40
codegen_flags: <defaults>
</compile_context>

<pallas_src>
import functools

import jax
import jax.numpy as jnp
from jax.experimental import pallas as pl
from jax.experimental.pallas import tpu as pltpu

LANES = 128
ACC_ROWS = 64          # 8 independent (8,128) sublane-group accumulators
MAX_TILE_ROWS = 8192   # 8192 x 128 f32 = 4 MiB per input block


def _charbonnier_kernel(x_ref, y_ref, out_ref, *, eps2, total, tile_r,
                        acc_rows, chunks_per_split):
    split = pl.program_id(0)
    step = pl.program_id(1)

    # The output block is VMEM-resident across the "arbitrary" reduction axis,
    # so it doubles as the accumulator.  Zero it at the start of each sweep.
    @pl.when(step == 0)
    def _():
        out_ref[...] = jnp.zeros_like(out_ref)

    # Widen to f32 in-kernel; HBM traffic stays at the native input dtype.
    d = x_ref[...].astype(jnp.float32) - y_ref[...].astype(jnp.float32)
    v = jnp.sqrt(d * d + jnp.float32(eps2))          # (tile_r, LANES)

    def _accumulate(vals):
        if tile_r == acc_rows:
            out_ref[...] += vals
        else:
            # Fold onto acc_rows/8 independent sublane-group accumulators:
            # pure VPU adds, several independent dependency chains, no XLU.
            out_ref[...] += jnp.sum(
                vals.reshape(tile_r // acc_rows, acc_rows, LANES), axis=0)

    # Flat element range this *logical* block covers (int32 scalar math).
    block_idx = split * chunks_per_split + step
    elem0 = block_idx * (tile_r * LANES)
    block_end = elem0 + tile_r * LANES

    # Fast path: block fully inside the valid range -> no mask work at all.
    @pl.when(block_end <= total)
    def _():
        _accumulate(v)

    # Boundary / overhang block: mask by global flat index.  Out-of-range
    # loads are undefined (cdiv overhang), but jnp.where selects 0.0 there,
    # so any garbage (even NaN) is dropped before it reaches the accumulator.
    @pl.when(block_end > total)
    def _():
        ridx = jax.lax.broadcasted_iota(jnp.int32, (tile_r, LANES), 0)
        cidx = jax.lax.broadcasted_iota(jnp.int32, (tile_r, LANES), 1)
        gidx = elem0 + ridx * LANES + cidx
        _accumulate(jnp.where(gidx < total, v, jnp.float32(0.0)))


def _cdiv(a, b):
    return -(-a // b)


def _two_tensorcores():
    """True on chips with 2 TensorCores per device (v4/v5p megacore, v7x)."""
    try:
        kind = jax.devices()[0].device_kind.lower()
    except Exception:
        return False
    return any(t in kind for t in ("v4", "v5p", "v7", "tpu7"))


def charbonnier_loss(x, y, eps=1e-3):
    """Pallas TPU implementation of CharbonnierLoss.forward(x, y)."""
    assert x.shape == y.shape, "x and y must have identical shapes"
    total = int(x.size)
    assert total > 0
    # Flat indices inside the kernel are int32.
    assert total < 2**31 - (MAX_TILE_ROWS + 8) * LANES, "input too large"

    eps2 = float(eps) * float(eps)
    rem = total % LANES
    rows = _cdiv(total, LANES)

    xf = x.reshape(-1)
    yf = y.reshape(-1)
    if rem:
        # TODO(synk): this rare (<128-element) zero-pad still costs one HBM
        # copy of each input; all other padding/copy paths have been removed.
        # The in-kernel mask vs. `total` also neutralises these pad zeros, so
        # no eps correction is needed.
        xf = jnp.pad(xf, (0, LANES - rem))
        yf = jnp.pad(yf, (0, LANES - rem))
    x2 = xf.reshape(rows, LANES)
    y2 = yf.reshape(rows, LANES)

    # Tile geometry.
    if rows > MAX_TILE_ROWS:
        tile_r, acc_rows = MAX_TILE_ROWS, ACC_ROWS
    else:
        # Single block covering everything: block dims == array dims, so any
        # row count is legal; pick the smallest legal accumulator height.
        tile_r = rows
        acc_rows = next((a for a in (64, 32, 16, 8) if rows % a == 0), rows)
    num_chunks = _cdiv(rows, tile_r)

    # Split the reduction across the two TensorCores only where they exist.
    num_splits = 2 if (_two_tensorcores() and num_chunks >= 2) else 1
    chunks_per_split = _cdiv(num_chunks, num_splits)

    # Clamp the input block index so an odd chunk count never produces a fully
    # out-of-range DMA window; the in-kernel mask (computed from the
    # *unclamped* logical position) zeroes any duplicated data.
    def in_map(c, i):
        return (jnp.minimum(c * chunks_per_split + i, num_chunks - 1), 0)

    kernel = functools.partial(
        _charbonnier_kernel, eps2=eps2, total=total, tile_r=tile_r,
        acc_rows=acc_rows, chunks_per_split=chunks_per_split)

    # VMEM budget: 2 inputs x 2 pipeline buffers + a few f32 block-sized
    # temporaries for the elementwise chain; stays below v7x's 64 MiB physical
    # VMEM even at 8192-row f32 blocks (and well below 128 MiB on v5e/v6e).
    block_in_bytes = tile_r * LANES * x.dtype.itemsize
    block_f32_bytes = tile_r * LANES * 4
    vmem_limit = 4 * block_in_bytes + 4 * block_f32_bytes + (8 << 20)
    vmem_limit = max(32 << 20, min(vmem_limit, 56 << 20))

    partial = pl.pallas_call(
        kernel,
        out_shape=jax.ShapeDtypeStruct((num_splits * acc_rows, LANES),
                                       jnp.float32),
        grid_spec=pltpu.PrefetchScalarGridSpec(
            num_scalar_prefetch=0,
            grid=(num_splits, chunks_per_split),
            in_specs=[
                pl.BlockSpec((tile_r, LANES), in_map),
                pl.BlockSpec((tile_r, LANES), in_map),
            ],
            out_specs=pl.BlockSpec((acc_rows, LANES), lambda c, i: (c, 0)),
        ),
        compiler_params=pltpu.CompilerParams(
            # NOTE: if xprof shows only one v7x TensorCore busy, switch the
            # first axis to pltpu.CORE_PARALLEL (codegen-level core split).
            dimension_semantics=("parallel", "arbitrary"),
            vmem_limit_bytes=int(vmem_limit),
        ),
    )(x2, y2)

    # Tiny (num_splits*acc_rows, 128) lane-dense partial sum: finish in JAX.
    return jnp.sum(partial, dtype=jnp.float32) / jnp.float32(total)


if __name__ == "__main__":
    key = jax.random.PRNGKey(0)
    kx, ky = jax.random.split(key)
    # Small NCHW shapes consistent with an image-restoration loss.
    x = jax.random.normal(kx, (2, 4, 16, 16), dtype=jnp.float32)
    y = jax.random.normal(ky, (2, 4, 16, 16), dtype=jnp.float32)

    loss = charbonnier_loss(x, y, eps=1e-3)
    jax.block_until_ready(loss)

    # Reference check (pure JAX, mirrors the PyTorch forward).
    diff = x - y
    ref = jnp.mean(jnp.sqrt(diff * diff + jnp.float32(1e-3) ** 2))
    assert jnp.allclose(loss, ref, rtol=1e-5, atol=1e-6), (loss, ref)

    print("KERNEL_OK")
</pallas_src>

<mosaic_0001>
module attributes {stable_mosaic.version = 11 : i64} {
  func.func @_charbonnier_kernel(%arg0: i32, %arg1: i32, %arg2: memref<16x128xf32, #tpu.memory_space<vmem>>, %arg3: memref<16x128xf32, #tpu.memory_space<vmem>>, %arg4: memref<16x128xf32, #tpu.memory_space<vmem>>) attributes {dimension_semantics = [#tpu.dimension_semantics<parallel>, #tpu.dimension_semantics<arbitrary>], iteration_bounds = array<i64: 1, 1>, scalar_prefetch = 0 : i64, scratch_operands = 0 : i64, tpu.core_type = #tpu.core_type<tc>, window_params = [{transform_indices = @transform_0, window_bounds = array<i64: 16, 128>}, {transform_indices = @transform_1, window_bounds = array<i64: 16, 128>}, {transform_indices = @transform_2, window_bounds = array<i64: 16, 128>}]} {
    %c0_i32 = arith.constant 0 : i32
    %0 = arith.cmpi eq, %arg1, %c0_i32 : i32
    %1 = arith.extui %0 : i1 to i32
    %c0_i32_0 = arith.constant 0 : i32
    %2 = arith.cmpi ne, %1, %c0_i32_0 : i32
    scf.if %2 {
      %cst_9 = arith.constant 0.000000e+00 : f32
      %20 = vector.broadcast %cst_9 : f32 to vector<16x128xf32>
      %c0_10 = arith.constant 0 : index
      %c0_11 = arith.constant 0 : index
      %21 = vector.load %arg4[%c0_10, %c0_11] : memref<16x128xf32, #tpu.memory_space<vmem>>, vector<16x128xf32>
      tpu.vector_store %arg4[%c0_10, %c0_11], %20 {strides = array<i32>} : memref<16x128xf32, #tpu.memory_space<vmem>>, vector<16x128xf32>,
    } else {
    }
    %c0 = arith.constant 0 : index
    %c0_1 = arith.constant 0 : index
    %3 = vector.load %arg2[%c0, %c0_1] : memref<16x128xf32, #tpu.memory_space<vmem>>, vector<16x128xf32>
    %c0_2 = arith.constant 0 : index
    %c0_3 = arith.constant 0 : index
    %4 = vector.load %arg3[%c0_2, %c0_3] : memref<16x128xf32, #tpu.memory_space<vmem>>, vector<16x128xf32>
    %5 = arith.subf %3, %4 : vector<16x128xf32>
    %6 = arith.mulf %5, %5 : vector<16x128xf32>
    %cst = arith.constant 9.99999997E-7 : f32
    %7 = vector.broadcast %cst : f32 to vector<16x128xf32>
    %8 = arith.addf %6, %7 : vector<16x128xf32>
    %9 = math.sqrt %8 : vector<16x128xf32>
    %c1_i32 = arith.constant 1 : i32
    %10 = arith.muli %arg0, %c1_i32 : i32
    %11 = arith.addi %10, %arg1 : i32
    %c2048_i32 = arith.constant 2048 : i32
    %12 = arith.muli %11, %c2048_i32 : i32
    %c2048_i32_4 = arith.constant 2048 : i32
    %13 = arith.addi %12, %c2048_i32_4 : i32
    %c2048_i32_5 = arith.constant 2048 : i32
    %14 = arith.cmpi sle, %13, %c2048_i32_5 : i32
    %15 = arith.extui %14 : i1 to i32
    %c0_i32_6 = arith.constant 0 : i32
    %16 = arith.cmpi ne, %15, %c0_i32_6 : i32
    scf.if %16 {
      %c0_9 = arith.constant 0 : index
      %c0_10 = arith.constant 0 : index
      %20 = vector.load %arg4[%c0_9, %c0_10] : memref<16x128xf32, #tpu.memory_space<vmem>>, vector<16x128xf32>
      %21 = arith.addf %20, %9 : vector<16x128xf32>
      %c0_11 = arith.constant 0 : index
      %c0_12 = arith.constant 0 : index
      %22 = vector.load %arg4[%c0_11, %c0_12] : memref<16x128xf32, #tpu.memory_space<vmem>>, vector<16x128xf32>
      tpu.vector_store %arg4[%c0_11, %c0_12], %21 {strides = array<i32>} : memref<16x128xf32, #tpu.memory_space<vmem>>, vector<16x128xf32>,
    } else {
    }
    %c2048_i32_7 = arith.constant 2048 : i32
    %17 = arith.cmpi sgt, %13, %c2048_i32_7 : i32
    %18 = arith.extui %17 : i1 to i32
    %c0_i32_8 = arith.constant 0 : i32
    %19 = arith.cmpi ne, %18, %c0_i32_8 : i32
    scf.if %19 {
      %20 = tpu.iota {dimensions = array<i32: 0>} : vector<16x128xi32>
      %21 = tpu.iota {dimensions = array<i32: 1>} : vector<16x128xi32>
      %c128_i32 = arith.constant 128 : i32
      %22 = vector.broadcast %c128_i32 : i32 to vector<16x128xi32>
      %23 = arith.muli %20, %22 : vector<16x128xi32>
      %24 = vector.broadcast %12 : i32 to vector<16x128xi32>
      %25 = arith.addi %24, %23 : vector<16x128xi32>
      %26 = arith.addi %25, %21 : vector<16x128xi32>
      %c2048_i32_9 = arith.constant 2048 : i32
      %27 = vector.broadcast %c2048_i32_9 : i32 to vector<16x128xi32>
      %28 = arith.cmpi slt, %26, %27 : vector<16x128xi32>
      %cst_10 = arith.constant 0.000000e+00 : f32
      %29 = vector.broadcast %cst_10 : f32 to vector<16x128xf32>
      %30 = arith.select %28, %9, %29 : vector<16x128xi1>, vector<16x128xf32>
      %c0_11 = arith.constant 0 : index
      %c0_12 = arith.constant 0 : index
      %31 = vector.load %arg4[%c0_11, %c0_12] : memref<16x128xf32, #tpu.memory_space<vmem>>, vector<16x128xf32>
      %32 = arith.addf %31, %30 : vector<16x128xf32>
      %c0_13 = arith.constant 0 : index
      %c0_14 = arith.constant 0 : index
      %33 = vector.load %arg4[%c0_13, %c0_14] : memref<16x128xf32, #tpu.memory_space<vmem>>, vector<16x128xf32>
      tpu.vector_store %arg4[%c0_13, %c0_14], %32 {strides = array<i32>} : memref<16x128xf32, #tpu.memory_space<vmem>>, vector<16x128xf32>,
    } else {
    }
    return
  }
  func.func @transform_0(%arg0: i32, %arg1: i32) -> (i32, i32) {
    %c1_i32 = arith.constant 1 : i32
    %0 = arith.muli %arg0, %c1_i32 : i32
    %1 = arith.addi %0, %arg1 : i32
    %c0_i32 = arith.constant 0 : i32
    %2 = arith.minsi %1, %c0_i32 : i32
    %c0_i32_0 = arith.constant 0 : i32
    %c0_i32_1 = arith.constant 0 : i32
    return %2, %c0_i32_0 : i32, i32
  }
  func.func @transform_1(%arg0: i32, %arg1: i32) -> (i32, i32) {
    %c1_i32 = arith.constant 1 : i32
    %0 = arith.muli %arg0, %c1_i32 : i32
    %1 = arith.addi %0, %arg1 : i32
    %c0_i32 = arith.constant 0 : i32
    %2 = arith.minsi %1, %c0_i32 : i32
    %c0_i32_0 = arith.constant 0 : i32
    %c0_i32_1 = arith.constant 0 : i32
    return %2, %c0_i32_0 : i32, i32
  }
  func.func @transform_2(%arg0: i32, %arg1: i32) -> (i32, i32) {
    %c0_i32 = arith.constant 0 : i32
    %c0_i32_0 = arith.constant 0 : i32
    return %arg0, %c0_i32 : i32, i32
  }
}

</mosaic_0001>

<llo_original>
// kernel: tpu_custom_call.1
$region0: #{tpu_custom_call.1}
  #allocation0 [shape = 'u32[]', space=smem, size = 0x4, offset = 0x4, fixed_abs, tag = 'smem constant byte address 0x4 - core index']
  #allocation1 [shape = 'u32[144,128]{1,0:T(1,128)}', space=vmem, size = 0x12000, scoped, tag = 'internal scratch']
  %s0 = inlined_call_operand.hbm [shape: f32[16,128], index: 0, kind: input, shape index: {}]
  %s1 = inlined_call_operand.hbm [shape: f32[16,128], index: 1, kind: input, shape index: {}]
  %s2 = inlined_call_operand.hbm [shape: f32[16,128], index: 2, kind: output, shape index: {}]
  %s3 = sld [smem:[#allocation0]]
  $region38: #{tpu_custom_call.1} parent=0
    _
  %s5 = ssub.s32 1, %s3
  %s6 = scalar_select 0, %s5, %s3
  $region1: #{tpu_custom_call.1} parent=0
    #allocation2 [shape = 'u8[8192]{0}', space=vmem, size = 0x2000, scoped, tag = 'input window, operand 0, single buffered']
    #allocation3 [shape = 's32[1]{0}', space=sflag, size = 0x4, scoped, tag = 'scoped memory for tpu_custom_call.1']
    #allocation4 [shape = 's32[1]{0}', space=sflag, size = 0x4, scoped, tag = 'scoped memory for tpu_custom_call.1']
    #allocation5 [shape = 'u8[8192]{0}', space=vmem, size = 0x2000, scoped, tag = 'input window, operand 1, single buffered']
    #allocation6 [shape = 's32[1]{0}', space=sflag, size = 0x4, scoped, tag = 'scoped memory for tpu_custom_call.1']
    #allocation7 [shape = 'u8[8192]{0}', space=vmem, size = 0x2000, scoped, tag = 'output window, operand 0, single buffered']
    %7 = vsyncpa [#allocation3], 0
    %8 = vsyncpa [#allocation6], 0
    %9 = vsyncpa [#allocation4], 0
    // Predicated region
    $region2: #{tpu_custom_call.1} parent=1 // pred_check
      _
    $region3: #{tpu_custom_call.1} parent=1 // pred_check_branch
      %11 = sbr.rel (0) target = $region5
    $region4: #{tpu_custom_call.1} parent=1 // pred_region
      %s12 = sadd.s32 0, 0
      %p13 = scmp.lt.s32.totalorder %s12, 0
      %s14 = scalar_select %p13, %s12, 0
      %s15 = smul.u32 2, %s14
      %s17 = ssub.s32 256, 256
      %18 = vsyncadd [#allocation3], %s17
      %s19 = smul.addr %s15, 128
      %s20 = scalar_lea.hbm %s0, %s19
      %s21 = sshll.u32 [#allocation2], 4
      %s22 = int_to_ptr.vmem [resolvable:$true] %s21
      %27 = dma.hbm_to_vmem [thread:$0]  %s20, 256, %s22, [#allocation3], 128, 128, 8
    $region5: #{tpu_custom_call.1} parent=1 // pred_fallthru
      _
    // Predicated region
    $region6: #{tpu_custom_call.1} parent=1 // pred_check
      _
    $region7: #{tpu_custom_call.1} parent=1 // pred_check_branch
      %29 = sbr.rel (0) target = $region9
    $region8: #{tpu_custom_call.1} parent=1 // pred_region
      %s30 = sadd.s32 0, 0
      %p31 = scmp.lt.s32.totalorder %s30, 0
      %s32 = scalar_select %p31, %s30, 0
      %s33 = smul.u32 2, %s32
      %s35 = ssub.s32 256, 256
      %36 = vsyncadd [#allocation6], %s35
      %s37 = smul.addr %s33, 128
      %s38 = scalar_lea.hbm %s1, %s37
      %s39 = sshll.u32 [#allocation5], 4
      %s40 = int_to_ptr.vmem [resolvable:$true] %s39
      %45 = dma.hbm_to_vmem [thread:$0]  %s38, 256, %s40, [#allocation6], 128, 128, 8
    $region9: #{tpu_custom_call.1} parent=1 // pred_fallthru
      _
    // Predicated region
    $region10: #{tpu_custom_call.1} parent=1 // pred_check
      _
    $region11: #{tpu_custom_call.1} parent=1 // pred_check_branch
      %47 = sbr.rel (0) target = $region13
    $region12: #{tpu_custom_call.1} parent=1 // pred_region
      %48 = dma.done [#allocation3], 256
    $region13: #{tpu_custom_call.1} parent=1 // pred_fallthru
      _
    // Predicated region
    $region14: #{tpu_custom_call.1} parent=1 // pred_check
      _
    $region15: #{tpu_custom_call.1} parent=1 // pred_check_branch
      %50 = sbr.rel (0) target = $region17
    $region16: #{tpu_custom_call.1} parent=1 // pred_region
      %51 = dma.done [#allocation6], 256
    $region17: #{tpu_custom_call.1} parent=1 // pred_fallthru
      _
    %s52 = sadd.s32 0, 0
    %p53 = scmp.lt.s32.totalorder %s52, 0
    %s54 = scalar_select %p53, %s52, 0
    %s55 = smul.u32 2, %s54
    %s56 = sadd.s32 0, 0
    %p57 = scmp.lt.s32.totalorder %s56, 0
    %s58 = scalar_select %p57, %s56, 0
    %s59 = smul.u32 2, %s58
    %p60 = scmp.eq.s32.totalorder 0, 0
    // Predicated region
    $region18: #{tpu_custom_call.1} parent=1 // pred_check
      %p61 = pneg %p60
    $region19: #{tpu_custom_call.1} parent=1 // pred_check_branch
      %63 = sbr.rel (%p61) target = $region21
    $region20: #{tpu_custom_call.1} parent=1 // pred_region
      %64 = vst [vmem:[#allocation7] sm:$0xff] 0.0
      %65 = vst [vmem:[#allocation7 + $0x8] sm:$0xff] 0.0
    $region21: #{tpu_custom_call.1} parent=1 // pred_fallthru
      _
    %v66 = vld [vmem:[#allocation2] sm:$0xff]
    %v67 = vld [vmem:[#allocation2 + $0x8] sm:$0xff]
    %v68 = vld [vmem:[#allocation5] sm:$0xff]
    %v69 = vld [vmem:[#allocation5 + $0x8] sm:$0xff]
    %v70 = vsub.f32 %v66, %v68
    %v71 = vsub.f32 %v67, %v69
    %v72 = vmul.f32 %v70, %v70
    %v73 = vmul.f32 %v71, %v71
    %v74 = vadd.f32 %v72, 1e-06
    %v75 = vadd.f32 %v73, 1e-06
    %v76 = vrsqrt.pop %v74
    %v77 = vmul.f32 %v74, %v76
    %vm78 = vcmp.eq.f32.partialorder %v74, inf
    %v79 = vsel %vm78, %v74, %v77
    %vm80 = vcmp.eq.f32.partialorder %v74, 0.0
    %v81 = vand.u32 %v74, 2147483648
    %v82 = vsel %vm80, %v81, %v79
    %v83 = vrsqrt.pop %v75
    %v84 = vmul.f32 %v75, %v83
    %vm85 = vcmp.eq.f32.partialorder %v75, inf
    %v86 = vsel %vm85, %v75, %v84
    %vm87 = vcmp.eq.f32.partialorder %v75, 0.0
    %v88 = vand.u32 %v75, 2147483648
    %v89 = vsel %vm87, %v88, %v86
    %s90 = sadd.s32 0, 0
    %s91 = smul.u32 %s90, 2048
    %s92 = sadd.s32 %s91, 2048
    %p93 = scmp.le.s32.totalorder %s92, 2048
    // Predicated region
    $region22: #{tpu_custom_call.1} parent=1 // pred_check
      %p94 = pneg %p93
    $region23: #{tpu_custom_call.1} parent=1 // pred_check_branch
      %96 = sbr.rel (%p94) target = $region25
    $region24: #{tpu_custom_call.1} parent=1 // pred_region
      %v97 = vld [vmem:[#allocation7] sm:$0xff]
      %v98 = vld [vmem:[#allocation7 + $0x8] sm:$0xff]
      %v99 = vadd.f32 %v97, %v82
      %v100 = vadd.f32 %v98, %v89
      %101 = vst [vmem:[#allocation7] sm:$0xff] %v99
      %102 = vst [vmem:[#allocation7 + $0x8] sm:$0xff] %v100
    $region25: #{tpu_custom_call.1} parent=1 // pred_fallthru
      _
    %p103 = scmp.gt.s32.totalorder %s92, 2048
    // Predicated region
    $region26: #{tpu_custom_call.1} parent=1 // pred_check
      %p104 = pneg %p103
    $region27: #{tpu_custom_call.1} parent=1 // pred_check_branch
      %106 = sbr.rel (%p104) target = $region29
    $region28: #{tpu_custom_call.1} parent=1 // pred_region
      %v107 = vlaneseq
      %v108 = vshrl.u32 %v107, 7
      %v109 = vadd.s32 %v108, 8
      %v110 = vlaneseq
      %v111 = vand.u32 %v110, 127
      %v112 = vmul.u32 %v108, 128
      %v113 = vmul.u32 %v109, 128
      %v114 = vstv %s91
      %v115 = vadd.s32 %v114, %v112
      %v116 = vadd.s32 %v114, %v113
      %v117 = vadd.s32 %v115, %v111
      %v118 = vadd.s32 %v116, %v111
      %vm119 = vcmp.lt.s32.totalorder %v117, 2048
      %vm120 = vcmp.lt.s32.totalorder %v118, 2048
      %v121 = vsel %vm119, %v82, 0.0
      %v122 = vsel %vm120, %v89, 0.0
      %v123 = vld [vmem:[#allocation7] sm:$0xff]
      %v124 = vld [vmem:[#allocation7 + $0x8] sm:$0xff]
      %v125 = vadd.f32 %v123, %v121
      %v126 = vadd.f32 %v124, %v122
      %127 = vst [vmem:[#allocation7] sm:$0xff] %v125
      %128 = vst [vmem:[#allocation7 + $0x8] sm:$0xff] %v126
    $region29: #{tpu_custom_call.1} parent=1 // pred_fallthru
      _
    // Predicated region
    $region30: #{tpu_custom_call.1} parent=1 // pred_check
      _
    $region31: #{tpu_custom_call.1} parent=1 // pred_check_branch
      %130 = sbr.rel (0) target = $region33
    $region32: #{tpu_custom_call.1} parent=1 // pred_region
      %s132 = ssub.s32 256, 256
      %133 = vsyncadd [#allocation4], %s132
      %s134 = sshll.u32 [#allocation7], 4
      %s135 = int_to_ptr.vmem [resolvable:$true] %s134
      %140 = dma.vmem_to_hbm [thread:$0]  %s135, 256, %s2, [#allocation4], 128, 128, 8
    $region33: #{tpu_custom_call.1} parent=1 // pred_fallthru
      _
    // Predicated region
    $region34: #{tpu_custom_call.1} parent=1 // pred_check
      _
    $region35: #{tpu_custom_call.1} parent=1 // pred_check_branch
      %142 = sbr.rel (0) target = $region37
    $region36: #{tpu_custom_call.1} parent=1 // pred_region
      %143 = dma.done [#allocation4], 256
    $region37: #{tpu_custom_call.1} parent=1 // pred_fallthru
      _
    %144 = vsyncpa [#allocation3], 1
    %145 = vsyncpa [#allocation6], 1
    %146 = vsyncpa [#allocation4], 1

</llo_original>
